<compile_context>
chip_gen: v5e
topology: v5e:2x2
jax: 0.10.0
libtpu: 0.0.40
codegen_flags: <defaults>
</compile_context>

<pallas_src>
import functools

import jax
import jax.numpy as jnp
from jax.experimental import pallas as pl
from jax.experimental.pallas import tpu as pltpu


def _round_up(x, m):
    return (x + m - 1) // m * m


def _proj_ln_kernel(x_ref, w_ref, b_ref, g_ref, beta_ref, o_ref, acc_ref):
    """NaN->0 + Linear(D_in -> H, bias) + LayerNorm(H, eps=1e-6), K-tiled."""
    k = pl.program_id(1)

    @pl.when(k == 0)
    def _():
        acc_ref[...] = jnp.zeros_like(acc_ref)

    # skip_nan_batches: element-wise NaN replacement with zeros (bf16 keeps NaN).
    x = x_ref[...]
    x = jnp.where(jnp.isnan(x), jnp.zeros_like(x), x)

    # bf16 x bf16 -> f32 on the MXU, accumulated in a resident f32 scratch.
    acc_ref[...] += jnp.dot(x, w_ref[...], preferred_element_type=jnp.float32)

    @pl.when(k == pl.num_programs(1) - 1)
    def _():
        h = acc_ref[...] + b_ref[...]          # f32 bias row, broadcast
        # Single-pass LayerNorm: var = E[h^2] - mean^2 (one centered temp less,
        # fewer XLU reductions / live vregs than the two-pass form).
        mean = jnp.mean(h, axis=-1, keepdims=True)
        mean_sq = jnp.mean(h * h, axis=-1, keepdims=True)
        var = jnp.maximum(mean_sq - mean * mean, 0.0)
        y = (h - mean) * jax.lax.rsqrt(var + 1e-6)
        o_ref[...] = (y * g_ref[...] + beta_ref[...]).astype(o_ref.dtype)


@functools.partial(jax.jit, static_argnames=("tb", "tk"))
def image_project_layernorm(image_features, w, b, gamma, beta, *, tb=8, tk=128):
    """image_layer_norm(image_projection(nan_to_zero(image_features))) -> bf16 [B, H]."""
    B, D = image_features.shape
    D_w, H = w.shape
    assert D_w == D
    # Real Phi-2 hidden_size (2560) is 128/256 aligned; keep H as the full,
    # lane-dense N dimension so the LayerNorm can be fused in-kernel.
    assert H % 128 == 0, "hidden_size must be a multiple of 128"

    B_pad = _round_up(B, tb)
    D_pad = _round_up(D, tk)

    x = image_features.astype(jnp.bfloat16)
    if (B_pad, D_pad) != (B, D):
        x = jnp.pad(x, ((0, B_pad - B), (0, D_pad - D)))
    w_bf16 = w.astype(jnp.bfloat16)
    if D_pad != D:
        w_bf16 = jnp.pad(w_bf16, ((0, D_pad - D), (0, 0)))

    b = b.astype(jnp.float32)
    gamma = gamma.astype(jnp.float32)
    beta = beta.astype(jnp.float32)

    grid = (B_pad // tb, D_pad // tk)

    # VMEM budget (double-buffered inputs/outputs + f32 accumulator), with
    # headroom; stays well inside v7x's 64 MiB for realistic tk=128..512.
    vmem_bytes = (
        2 * tb * tk * 2          # x tiles (bf16), double-buffered
        + 2 * tk * H * 2         # weight tiles (bf16), double-buffered
        + 3 * 2 * H * 4          # bias / gamma / beta rows (f32)
        + 2 * tb * H * 2         # output tile (bf16), double-buffered
        + tb * H * 4             # f32 accumulator scratch
    )
    vmem_limit = min(max(2 * vmem_bytes, 4 * 1024 * 1024), 48 * 1024 * 1024)

    cost = pl.CostEstimate(
        flops=2 * B_pad * D_pad * H,
        transcendentals=B_pad,                               # one rsqrt per row
        bytes_accessed=(B_pad * D_pad * 2 + D_pad * H * 2    # x + W (bf16)
                        + 3 * H * 4                          # bias/gamma/beta
                        + B_pad * H * 2),                    # output (bf16)
    )

    out = pl.pallas_call(
        _proj_ln_kernel,
        out_shape=jax.ShapeDtypeStruct((B_pad, H), jnp.bfloat16),
        grid_spec=pltpu.PrefetchScalarGridSpec(
            num_scalar_prefetch=0,
            grid=grid,
            in_specs=[
                pl.BlockSpec((tb, tk), lambda bi, ki: (bi, ki)),  # x tile
                pl.BlockSpec((tk, H), lambda bi, ki: (ki, 0)),    # weight tile
                pl.BlockSpec((1, H), lambda bi, ki: (0, 0)),      # bias row
                pl.BlockSpec((1, H), lambda bi, ki: (0, 0)),      # LN gamma
                pl.BlockSpec((1, H), lambda bi, ki: (0, 0)),      # LN beta
            ],
            out_specs=pl.BlockSpec((tb, H), lambda bi, ki: (bi, 0)),
            scratch_shapes=[pltpu.VMEM((tb, H), jnp.float32)],
        ),
        compiler_params=pltpu.CompilerParams(
            dimension_semantics=("parallel", "arbitrary"),
            vmem_limit_bytes=vmem_limit,
        ),
        cost_estimate=cost,
    )(x, w_bf16, b, gamma, beta)

    return out[:B]


def vlm_phi2_forward(params, image_features, input_ids, attention_mask, labels):
    # --- Pallas hot path: NaN-cleanup + image_projection + image_layer_norm ---
    image_hidden = image_project_layernorm(
        image_features, params["proj_w"], params["proj_b"],
        params["ln_gamma"], params["ln_beta"])                     # [B, H] bf16

    B, S = input_ids.shape
    embed_dtype = params["embed_table"].dtype

    # Build [B, S+1, H] directly: gather with a dummy leading token id, then
    # overwrite slot 0 with the image embedding.  Avoids concatenating / copying
    # the whole [B, S, H] text-embedding slab just to prepend one token; the
    # dynamic_update_slice is lowered in place by XLA.
    ext_ids = jnp.concatenate(
        [jnp.zeros((B, 1), input_ids.dtype), input_ids], axis=1)   # [B, S+1] ints (cheap)
    extended_embeds = jnp.take(params["embed_table"], ext_ids, axis=0)  # [B, S+1, H]
    extended_embeds = jax.lax.dynamic_update_slice(
        extended_embeds,
        image_hidden[:, None, :].astype(embed_dtype),
        (0, 0, 0))

    # TODO(synk): the secondary defensive NaN->(randn*0.01) replacement on
    # extended_embeds is data-dependent control flow in the reference and is
    # omitted; the primary NaN path (image features) is handled in the kernel.

    extended_attention_mask = jnp.concatenate(
        [jnp.ones((B, 1), dtype=attention_mask.dtype), attention_mask], axis=1)
    extended_labels = jnp.concatenate(
        [jnp.full((B, 1), -100, dtype=labels.dtype), labels], axis=1)

    # TODO(synk): self.base_model (full pretrained Phi-2 LM) is an external
    # module and is not translated; we return its prepared inputs.
    return extended_embeds, extended_attention_mask, extended_labels


if __name__ == "__main__":
    # Small, TPU-aligned shapes consistent with the forward:
    #   image_features: [B, embedding_dim]; input_ids/attention_mask/labels: [B, S]
    B, D_IN, H, S, VOCAB = 4, 256, 256, 8, 128
    init_scale = 0.02

    key = jax.random.PRNGKey(0)
    k1, k2, k3, k4 = jax.random.split(key, 4)

    params = {
        # nn.Linear(embedding_dim, hidden_size): weight ~ N(0, init_scale), bias = 0
        # (weight pre-transposed to [D_in, H] and stored bf16 for the MXU).
        "proj_w": (jax.random.normal(k1, (D_IN, H), jnp.float32)
                   * init_scale).astype(jnp.bfloat16),
        "proj_b": jnp.zeros((1, H), jnp.float32),
        # nn.LayerNorm(hidden_size, eps=1e-6): gamma = 1, beta = 0
        "ln_gamma": jnp.ones((1, H), jnp.float32),
        "ln_beta": jnp.zeros((1, H), jnp.float32),
        # stand-in for the base_model input embedding table (bf16, like Phi-2).
        "embed_table": (jax.random.normal(k2, (VOCAB, H), jnp.float32)
                        * 0.02).astype(jnp.bfloat16),
    }

    image_features = jax.random.normal(k3, (B, D_IN), jnp.float32)
    # inject a NaN to exercise the skip_nan_batches path
    image_features = image_features.at[0, 0].set(jnp.nan)

    input_ids = jax.random.randint(k4, (B, S), 0, VOCAB, dtype=jnp.int32)
    attention_mask = jnp.ones((B, S), dtype=jnp.int32)
    labels = jnp.where(attention_mask == 1, input_ids, -100).astype(jnp.int32)

    fwd = jax.jit(vlm_phi2_forward)
    ext_embeds, ext_mask, ext_labels = fwd(
        params, image_features, input_ids, attention_mask, labels)
    jax.block_until_ready((ext_embeds, ext_mask, ext_labels))

    assert ext_embeds.shape == (B, S + 1, H)
    assert ext_embeds.dtype == jnp.bfloat16
    assert ext_mask.shape == (B, S + 1)
    assert ext_labels.shape == (B, S + 1)
    assert not bool(jnp.isnan(ext_embeds.astype(jnp.float32)).any())
    assert bool((ext_mask[:, 0] == 1).all())
    assert bool((ext_labels[:, 0] == -100).all())

    print("KERNEL_OK")
</pallas_src>

<mosaic_0001>
module attributes {stable_mosaic.version = 11 : i64} {
  func.func @_proj_ln_kernel(%arg0: i32, %arg1: i32, %arg2: memref<8x128xbf16, #tpu.memory_space<vmem>>, %arg3: memref<128x256xbf16, #tpu.memory_space<vmem>>, %arg4: memref<1x256xf32, #tpu.memory_space<vmem>>, %arg5: memref<1x256xf32, #tpu.memory_space<vmem>>, %arg6: memref<1x256xf32, #tpu.memory_space<vmem>>, %arg7: memref<8x256xbf16, #tpu.memory_space<vmem>>, %arg8: memref<8x256xf32, #tpu.memory_space<vmem>>) attributes {dimension_semantics = [#tpu.dimension_semantics<parallel>, #tpu.dimension_semantics<arbitrary>], iteration_bounds = array<i64: 1, 2>, scalar_prefetch = 0 : i64, scratch_operands = 1 : i64, tpu.core_type = #tpu.core_type<tc>, window_params = [{transform_indices = @transform_0, window_bounds = array<i64: 8, 128>}, {transform_indices = @transform_1, window_bounds = array<i64: 128, 256>}, {pipeline_mode = #tpu.pipeline_mode<synchronous>, transform_indices = @transform_2, window_bounds = array<i64: 1, 256>}, {pipeline_mode = #tpu.pipeline_mode<synchronous>, transform_indices = @transform_3, window_bounds = array<i64: 1, 256>}, {pipeline_mode = #tpu.pipeline_mode<synchronous>, transform_indices = @transform_4, window_bounds = array<i64: 1, 256>}, {transform_indices = @transform_5, window_bounds = array<i64: 8, 256>}]} {
    %c0_i32 = arith.constant 0 : i32
    %0 = arith.cmpi eq, %arg1, %c0_i32 : i32
    %1 = arith.extui %0 : i1 to i32
    %c0_i32_0 = arith.constant 0 : i32
    %2 = arith.cmpi ne, %1, %c0_i32_0 : i32
    scf.if %2 {
      %cst_10 = arith.constant 0.000000e+00 : f32
      %15 = vector.broadcast %cst_10 : f32 to vector<8x256xf32>
      %c0_11 = arith.constant 0 : index
      %c0_12 = arith.constant 0 : index
      %16 = vector.load %arg8[%c0_11, %c0_12] : memref<8x256xf32, #tpu.memory_space<vmem>>, vector<8x256xf32>
      tpu.vector_store %arg8[%c0_11, %c0_12], %15 {strides = array<i32>} : memref<8x256xf32, #tpu.memory_space<vmem>>, vector<8x256xf32>,
    } else {
    }
    %c0 = arith.constant 0 : index
    %c0_1 = arith.constant 0 : index
    %3 = vector.load %arg2[%c0, %c0_1] : memref<8x128xbf16, #tpu.memory_space<vmem>>, vector<8x128xbf16>
    %4 = arith.cmpf one, %3, %3 : vector<8x128xbf16>
    %cst = arith.constant 0.000000e+00 : bf16
    %5 = vector.broadcast %cst : bf16 to vector<8x128xbf16>
    %6 = arith.select %4, %5, %3 : vector<8x128xi1>, vector<8x128xbf16>
    %c0_2 = arith.constant 0 : index
    %c0_3 = arith.constant 0 : index
    %7 = vector.load %arg8[%c0_2, %c0_3] : memref<8x256xf32, #tpu.memory_space<vmem>>, vector<8x256xf32>
    %c0_4 = arith.constant 0 : index
    %c0_5 = arith.constant 0 : index
    %8 = vector.load %arg3[%c0_4, %c0_5] : memref<128x256xbf16, #tpu.memory_space<vmem>>, vector<128x256xbf16>
    %cst_6 = arith.constant dense<0.000000e+00> : vector<8x256xf32>
    %9 = tpu.matmul %6, %8, %cst_6 {dimension_numbers = #tpu.dot_dimension_numbers<[1], [0], [0], [1], [0, 0, 1, 1], [], []>} : vector<8x128xbf16>, vector<128x256xbf16>, vector<8x256xf32> -> vector<8x256xf32>
    %10 = arith.addf %7, %9 : vector<8x256xf32>
    %c0_7 = arith.constant 0 : index
    %c0_8 = arith.constant 0 : index
    %11 = vector.load %arg8[%c0_7, %c0_8] : memref<8x256xf32, #tpu.memory_space<vmem>>, vector<8x256xf32>
    tpu.vector_store %arg8[%c0_7, %c0_8], %10 {strides = array<i32>} : memref<8x256xf32, #tpu.memory_space<vmem>>, vector<8x256xf32>,
    %c1_i32 = arith.constant 1 : i32
    %12 = arith.cmpi eq, %arg1, %c1_i32 : i32
    %13 = arith.extui %12 : i1 to i32
    %c0_i32_9 = arith.constant 0 : i32
    %14 = arith.cmpi ne, %13, %c0_i32_9 : i32
    scf.if %14 {
      %c0_10 = arith.constant 0 : index
      %c0_11 = arith.constant 0 : index
      %15 = vector.load %arg8[%c0_10, %c0_11] : memref<8x256xf32, #tpu.memory_space<vmem>>, vector<8x256xf32>
      %c0_12 = arith.constant 0 : index
      %c0_13 = arith.constant 0 : index
      %16 = vector.load %arg4[%c0_12, %c0_13] : memref<1x256xf32, #tpu.memory_space<vmem>>, vector<1x256xf32>
      %17 = vector.broadcast %16 : vector<1x256xf32> to vector<8x256xf32>
      %18 = arith.addf %15, %17 : vector<8x256xf32>
      %cst_14 = arith.constant dense<0.000000e+00> : vector<8xf32>
      %19 = vector.multi_reduction <add>, %18, %cst_14 [1] : vector<8x256xf32> to vector<8xf32>
      %20 = vector.shape_cast %19 : vector<8xf32> to vector<8x1xf32>
      %cst_15 = arith.constant 2.560000e+02 : f32
      %21 = vector.broadcast %cst_15 : f32 to vector<8x1xf32>
      %22 = arith.divf %20, %21 : vector<8x1xf32>
      %23 = arith.mulf %18, %18 : vector<8x256xf32>
      %cst_16 = arith.constant dense<0.000000e+00> : vector<8xf32>
      %24 = vector.multi_reduction <add>, %23, %cst_16 [1] : vector<8x256xf32> to vector<8xf32>
      %25 = vector.shape_cast %24 : vector<8xf32> to vector<8x1xf32>
      %cst_17 = arith.constant 2.560000e+02 : f32
      %26 = vector.broadcast %cst_17 : f32 to vector<8x1xf32>
      %27 = arith.divf %25, %26 : vector<8x1xf32>
      %28 = arith.mulf %22, %22 : vector<8x1xf32>
      %29 = arith.subf %27, %28 : vector<8x1xf32>
      %cst_18 = arith.constant 0.000000e+00 : f32
      %30 = vector.broadcast %cst_18 : f32 to vector<8x1xf32>
      %31 = arith.maximumf %29, %30 : vector<8x1xf32>
      %32 = vector.broadcast %22 : vector<8x1xf32> to vector<8x256xf32>
      %33 = arith.subf %18, %32 : vector<8x256xf32>
      %cst_19 = arith.constant 9.99999997E-7 : f32
      %34 = vector.broadcast %cst_19 : f32 to vector<8x1xf32>
      %35 = arith.addf %31, %34 : vector<8x1xf32>
      %36 = math.rsqrt %35 : vector<8x1xf32>
      %37 = vector.broadcast %36 : vector<8x1xf32> to vector<8x256xf32>
      %38 = arith.mulf %33, %37 : vector<8x256xf32>
      %c0_20 = arith.constant 0 : index
      %c0_21 = arith.constant 0 : index
      %39 = vector.load %arg5[%c0_20, %c0_21] : memref<1x256xf32, #tpu.memory_space<vmem>>, vector<1x256xf32>
      %40 = vector.broadcast %39 : vector<1x256xf32> to vector<8x256xf32>
      %41 = arith.mulf %38, %40 : vector<8x256xf32>
      %c0_22 = arith.constant 0 : index
      %c0_23 = arith.constant 0 : index
      %42 = vector.load %arg6[%c0_22, %c0_23] : memref<1x256xf32, #tpu.memory_space<vmem>>, vector<1x256xf32>
      %43 = vector.broadcast %42 : vector<1x256xf32> to vector<8x256xf32>
      %44 = arith.addf %41, %43 : vector<8x256xf32>
      %45 = arith.truncf %44 : vector<8x256xf32> to vector<8x256xbf16>
      %c0_24 = arith.constant 0 : index
      %c0_25 = arith.constant 0 : index
      %46 = vector.load %arg7[%c0_24, %c0_25] : memref<8x256xbf16, #tpu.memory_space<vmem>>, vector<8x256xbf16>
      tpu.vector_store %arg7[%c0_24, %c0_25], %45 {strides = array<i32>} : memref<8x256xbf16, #tpu.memory_space<vmem>>, vector<8x256xbf16>,
    } else {
    }
    return
  }
  func.func @transform_0(%arg0: i32, %arg1: i32) -> (i32, i32) {
    %c0_i32 = arith.constant 0 : i32
    return %arg0, %arg1 : i32, i32
  }
  func.func @transform_1(%arg0: i32, %arg1: i32) -> (i32, i32) {
    %c0_i32 = arith.constant 0 : i32
    %c0_i32_0 = arith.constant 0 : i32
    return %arg1, %c0_i32 : i32, i32
  }
  func.func @transform_2(%arg0: i32, %arg1: i32) -> (i32, i32) {
    %c0_i32 = arith.constant 0 : i32
    %c0_i32_0 = arith.constant 0 : i32
    %c0_i32_1 = arith.constant 0 : i32
    return %c0_i32, %c0_i32_0 : i32, i32
  }
  func.func @transform_3(%arg0: i32, %arg1: i32) -> (i32, i32) {
    %c0_i32 = arith.constant 0 : i32
    %c0_i32_0 = arith.constant 0 : i32
    %c0_i32_1 = arith.constant 0 : i32
    return %c0_i32, %c0_i32_0 : i32, i32
  }
  func.func @transform_4(%arg0: i32, %arg1: i32) -> (i32, i32) {
    %c0_i32 = arith.constant 0 : i32
    %c0_i32_0 = arith.constant 0 : i32
    %c0_i32_1 = arith.constant 0 : i32
    return %c0_i32, %c0_i32_0 : i32, i32
  }
  func.func @transform_5(%arg0: i32, %arg1: i32) -> (i32, i32) {
    %c0_i32 = arith.constant 0 : i32
    %c0_i32_0 = arith.constant 0 : i32
    return %arg0, %c0_i32 : i32, i32
  }
}

</mosaic_0001>

<llo_original>
// kernel: image_project_layernorm.1
$region0: #{image_project_layernorm.1}
  #allocation0 [shape = 'u32[]', space=smem, size = 0x4, offset = 0x4, fixed_abs, tag = 'smem constant byte address 0x4 - core index']
  #allocation1 [shape = 'u32[72,128]{1,0:T(1,128)}', space=vmem, size = 0x9000, scoped, tag = 'internal scratch']
  #allocation2 [shape = 'f32[8,256]{1,0:T(8,128)}', space=vmem, size = 0x2000, scoped, tag = 'scratch operand']
  %s0 = inlined_call_operand.vmem [shape: bf16[8,256], index: 0, kind: input, shape index: {}]
  %s1 = inlined_call_operand.hbm [shape: bf16[256,256], index: 1, kind: input, shape index: {}]
  %s2 = inlined_call_operand.vmem [shape: f32[1,256], index: 2, kind: input, shape index: {}]
  %s3 = inlined_call_operand.vmem [shape: f32[1,256], index: 3, kind: input, shape index: {}]
  %s4 = inlined_call_operand.vmem [shape: f32[1,256], index: 4, kind: input, shape index: {}]
  %s5 = inlined_call_operand.vmem [shape: bf16[8,256], index: 5, kind: output, shape index: {}]
  %s6 = sld [smem:[#allocation0]]
  $region65: #{image_project_layernorm.1} parent=0
    _
  %s8 = ssub.s32 1, %s6
  %s9 = scalar_select 0, %s8, %s6
  $region1: #{image_project_layernorm.1} parent=0
    #allocation3 [shape = 'u8[131072]{0}', space=vmem, size = 0x20000, scoped, tag = 'input window, operand 1']
    #allocation4 [shape = 's32[2]{0}', space=sflag, size = 0x8, scoped, tag = 'scoped memory for image_project_layernorm.1']
    %10 = vsyncpa [#allocation4], 0
    %s11 = scalar_lea.sflag [#allocation4], 1
    %12 = vsyncpa %s11, 0
    loop: start=0, step=1, limit=4
    $region2: #{image_project_layernorm.1} parent=1 // loop_pre_header
      _
    $region3: #{image_project_layernorm.1} parent=1 // loop_header
      %s14 = sphi 0, %s18
      %p15 = scmp.ge.s32.totalorder %s14, 4
      %s21 = sphi 0, %s33
      %s22 = sphi 0, %s29
      %s23 = sphi 0, %s21
      %s24 = sphi 0, %s22
      %s25 = sphi 0, %s23
      %s26 = sphi 0, %s24
      %s38 = sphi 0, %s40
      %s41 = sphi 0, %s38
      %s42 = sphi 0, %s41
      %s58 = sphi 0, %s42
      %s64 = sphi 0, %s66
      %s67 = sphi 0, %s64
      %s68 = sphi 0, %s67
      %s84 = sphi 0, %s68
      %s88 = sphi 0, %s88
      %s90 = sphi 0, %s88
      %s91 = sphi 0, %s90
      %s105 = sphi 0, %s91
      %s109 = sphi 0, %s109
      %s111 = sphi 0, %s109
      %s112 = sphi 0, %s111
      %s126 = sphi 0, %s112
      %s130 = sphi 0, %s130
      %s132 = sphi 0, %s130
      %s133 = sphi 0, %s132
      %s147 = sphi 0, %s133
      %s153 = sphi 0, %s155
      %s156 = sphi 0, %s153
      %s157 = sphi 0, %s156
      %s173 = sphi 0, %s157
    $region4: #{image_project_layernorm.1} parent=1 // loop_header_branch
      %17 = sbr.rel (%p15) target = $region8
    $region5: #{image_project_layernorm.1} parent=1 // loop_body
      %s19 = ssub.s32 %s14, 1
      %s20 = ssub.s32 %s14, 2
      %s27 = sadd.s32 1, %s22
      %p28 = scmp.ge.s32.totalorder %s27, 2
      %s29 = scalar_select %p28, 0, %s27
      %s30 = sadd.s32 1, %s21
      %s31 = scalar_select %p28, %s30, %s21
      %p32 = scmp.ge.s32.totalorder %s31, 1
      %s33 = scalar_select %p32, 0, %s31
      %s34 = ssub.s32 %s21, %s33
      %s35 = ssub.s32 %s22, %s29
      %s36 = sor.u32 %s34, %s35
      %p37 = scmp.eq.s32.totalorder %s36, 0
      %s39 = sadd.s32 %s38, 1
      %s40 = scalar_select %p37, %s38, %s39
      %p43 = pneg %p37
      %p44 = scmp.eq.s32.totalorder %s14, 1
      %p45 = por %p43, %p44
      %p46 = scmp.ne.s32.totalorder %s38, %s41
      %p47 = scmp.eq.s32.totalorder %s14, 0
      %p48 = por %p46, %p47
      %p49 = scmp.ne.s32.totalorder %s38, %s41
      %p50 = scmp.eq.s32.totalorder %s19, 1
      %p51 = por %p49, %p50
      %p52 = scmp.ne.s32.totalorder %s41, %s42
      %p53 = scmp.eq.s32.totalorder %s19, 0
      %p54 = por %p52, %p53
      %p55 = scmp.ne.s32.totalorder %s41, %s42
      %p56 = scmp.eq.s32.totalorder %s20, 1
      %p57 = por %p55, %p56
      %p59 = scmp.ne.s32.totalorder %s42, %s58
      %p60 = scmp.eq.s32.totalorder %s20, 0
      %p61 = por %p59, %p60
      %s62 = ssub.s32 %s22, %s29
      %p63 = scmp.eq.s32.totalorder %s62, 0
      %s65 = sadd.s32 %s64, 1
      %s66 = scalar_select %p63, %s64, %s65
      %p69 = pneg %p63
      %p70 = scmp.eq.s32.totalorder %s14, 1
      %p71 = por %p69, %p70
      %p72 = scmp.ne.s32.totalorder %s64, %s67
      %p73 = scmp.eq.s32.totalorder %s14, 0
      %p74 = por %p72, %p73
      %p75 = scmp.ne.s32.totalorder %s64, %s67
      %p76 = scmp.eq.s32.totalorder %s19, 1
      %p77 = por %p75, %p76
      %p78 = scmp.ne.s32.totalorder %s67, %s68
      %p79 = scmp.eq.s32.totalorder %s19, 0
      %p80 = por %p78, %p79
      %p81 = scmp.ne.s32.totalorder %s67, %s68
      %p82 = scmp.eq.s32.totalorder %s20, 1
      %p83 = por %p81, %p82
      %p85 = scmp.ne.s32.totalorder %s68, %s84
      %p86 = scmp.eq.s32.totalorder %s20, 0
      %p87 = por %p85, %p86
      %s89 = sadd.s32 %s88, 1
      %p92 = scmp.eq.s32.totalorder %s14, 1
      %p93 = scmp.ne.s32.totalorder %s88, %s90
      %p94 = scmp.eq.s32.totalorder %s14, 0
      %p95 = por %p93, %p94
      %p96 = scmp.ne.s32.totalorder %s88, %s90
      %p97 = scmp.eq.s32.totalorder %s19, 1
      %p98 = por %p96, %p97
      %p99 = scmp.ne.s32.totalorder %s90, %s91
      %p100 = scmp.eq.s32.totalorder %s19, 0
      %p101 = por %p99, %p100
      %p102 = scmp.ne.s32.totalorder %s90, %s91
      %p103 = scmp.eq.s32.totalorder %s20, 1
      %p104 = por %p102, %p103
      %p106 = scmp.ne.s32.totalorder %s91, %s105
      %p107 = scmp.eq.s32.totalorder %s20, 0
      %p108 = por %p106, %p107
      %s110 = sadd.s32 %s109, 1
      %p113 = scmp.eq.s32.totalorder %s14, 1
      %p114 = scmp.ne.s32.totalorder %s109, %s111
      %p115 = scmp.eq.s32.totalorder %s14, 0
      %p116 = por %p114, %p115
      %p117 = scmp.ne.s32.totalorder %s109, %s111
      %p118 = scmp.eq.s32.totalorder %s19, 1
      %p119 = por %p117, %p118
      %p120 = scmp.ne.s32.totalorder %s111, %s112
      %p121 = scmp.eq.s32.totalorder %s19, 0
      %p122 = por %p120, %p121
      %p123 = scmp.ne.s32.totalorder %s111, %s112
      %p124 = scmp.eq.s32.totalorder %s20, 1
      %p125 = por %p123, %p124
      %p127 = scmp.ne.s32.totalorder %s112, %s126
      %p128 = scmp.eq.s32.totalorder %s20, 0
      %p129 = por %p127, %p128
      %s131 = sadd.s32 %s130, 1
      %p134 = scmp.eq.s32.totalorder %s14, 1
      %p135 = scmp.ne.s32.totalorder %s130, %s132
      %p136 = scmp.eq.s32.totalorder %s14, 0
      %p137 = por %p135, %p136
      %p138 = scmp.ne.s32.totalorder %s130, %s132
      %p139 = scmp.eq.s32.totalorder %s19, 1
      %p140 = por %p138, %p139
      %p141 = scmp.ne.s32.totalorder %s132, %s133
      %p142 = scmp.eq.s32.totalorder %s19, 0
      %p143 = por %p141, %p142
      %p144 = scmp.ne.s32.totalorder %s132, %s133
      %p145 = scmp.eq.s32.totalorder %s20, 1
      %p146 = por %p144, %p145
      %p148 = scmp.ne.s32.totalorder %s133, %s147
      %p149 = scmp.eq.s32.totalorder %s20, 0
      %p150 = por %p148, %p149
      %s151 = ssub.s32 %s21, %s33
      %p152 = scmp.eq.s32.totalorder %s151, 0
      %s154 = sadd.s32 %s153, 1
      %s155 = scalar_select %p152, %s153, %s154
      %p158 = pneg %p152
      %p159 = scmp.eq.s32.totalorder %s14, 1
      %p160 = por %p158, %p159
      %p161 = scmp.ne.s32.totalorder %s153, %s156
      %p162 = scmp.eq.s32.totalorder %s14, 0
      %p163 = por %p161, %p162
      %p164 = scmp.ne.s32.totalorder %s153, %s156
      %p165 = scmp.eq.s32.totalorder %s19, 1
      %p166 = por %p164, %p165
      %p167 = scmp.ne.s32.totalorder %s156, %s157
      %p168 = scmp.eq.s32.totalorder %s19, 0
      %p169 = por %p167, %p168
      %p170 = scmp.ne.s32.totalorder %s156, %s157
      %p171 = scmp.eq.s32.totalorder %s20, 1
      %p172 = por %p170, %p171
      %p174 = scmp.ne.s32.totalorder %s157, %s173
      %p175 = scmp.eq.s32.totalorder %s20, 0
      %p176 = por %p174, %p175
      %p177 = scmp.le.s32.totalorder 1, %s14
      %p178 = scmp.lt.s32.totalorder %s14, 3
      %p179 = pnand %p177, %p178
      %p180 = pneg %p179
      // Predicated region
      $region9: #{image_project_layernorm.1} parent=5 // pred_check
        _
      $region10: #{image_project_layernorm.1} parent=5 // pred_check_branch
        %182 = sbr.rel (%p179) target = $region12
      $region11: #{image_project_layernorm.1} parent=5 // pred_region
        %s183 = ssub.s32 %s14, 1
        // Predicated region
        $region13: #{image_project_layernorm.1} parent=11 // pred_check
          %p184 = pneg %p101
        $region14: #{image_project_layernorm.1} parent=11 // pred_check_branch
          %186 = sbr.rel (%p184) target = $region16
        $region15: #{image_project_layernorm.1} parent=11 // pred_region
          _
        $region16: #{image_project_layernorm.1} parent=11 // pred_fallthru
          _
        // Predicated region
        $region17: #{image_project_layernorm.1} parent=11 // pred_check
          %p187 = pneg %p122
        $region18: #{image_project_layernorm.1} parent=11 // pred_check_branch
          %189 = sbr.rel (%p187) target = $region20
        $region19: #{image_project_layernorm.1} parent=11 // pred_region
          _
        $region20: #{image_project_layernorm.1} parent=11 // pred_fallthru
          _
        // Predicated region
        $region21: #{image_project_layernorm.1} parent=11 // pred_check
          %p190 = pneg %p143
        $region22: #{image_project_layernorm.1} parent=11 // pred_check_branch
          %192 = sbr.rel (%p190) target = $region24
        $region23: #{image_project_layernorm.1} parent=11 // pred_region
          _
        $region24: #{image_project_layernorm.1} parent=11 // pred_fallthru
          _
      $region12: #{image_project_layernorm.1} parent=5 // pred_fallthru
        _
      %p193 = scmp.lt.s32.totalorder %s14, 2
      // Predicated region
      $region25: #{image_project_layernorm.1} parent=5 // pred_check
        %p194 = pneg %p193
      $region26: #{image_project_layernorm.1} parent=5 // pred_check_branch
        %196 = sbr.rel (%p194) target = $region28
      $region27: #{image_project_layernorm.1} parent=5 // pred_region
        // Predicated region
        $region29: #{image_project_layernorm.1} parent=27 // pred_check
          %p197 = pneg %p48
        $region30: #{image_project_layernorm.1} parent=27 // pred_check_branch
          %199 = sbr.rel (%p197) target = $region32
        $region31: #{image_project_layernorm.1} parent=27 // pred_region
          %p200 = scmp.lt.s32.totalorder %s21, 0
          %s201 = scalar_select %p200, %s21, 0
          %p202 = scmp.lt.s32.totalorder %s22, 1
          %s203 = scalar_select %p202, %s22, 1
          %s204 = smul.addr %s201, 2
          %s205 = sadd.s32 %s203, %s204
          %s206 = smul.addr %s205, 4
          %s207 = scalar_lea.vmem %s0, %s206
        $region32: #{image_project_layernorm.1} parent=27 // pred_fallthru
          _
        // Predicated region
        $region33: #{image_project_layernorm.1} parent=27 // pred_check
          %p208 = pneg %p74
        $region34: #{image_project_layernorm.1} parent=27 // pred_check_branch
          %210 = sbr.rel (%p208) target = $region36
        $region35: #{image_project_layernorm.1} parent=27 // pred_region
          %s211 = sand.u32 %s64, 1
          %s212 = scalar_lea.sflag [#allocation4], %s211
          %s213 = sand.u32 %s64, 1
          %s214 = smul.addr %s213, 128
          %s215 = scalar_lea.vmem [#allocation3], %s214
          %s216 = smul.u32 16, %s22
          %218 = vsyncadd %s212, 0
          %s219 = smul.addr %s216, 2
          %s220 = smul.addr %s219, 4
          %s221 = scalar_lea.hbm %s1, %s220
          %s222 = sshll.u32 %s221, 4
          %s223 = int_to_ptr.hbm [resolvable:$true] %s222
          %s224 = sshll.u32 %s215, 4
          %s225 = int_to_ptr.vmem [resolvable:$true] %s224
          %230 = dma.hbm_to_vmem [thread:$0]  %s223, 2048, %s225, %s212, 128, 128, 8
        $region36: #{image_project_layernorm.1} parent=27 // pred_fallthru
          _
      $region28: #{image_project_layernorm.1} parent=5 // pred_fallthru
        _
      %p231 = scmp.le.s32.totalorder 1, %s14
      %p232 = scmp.lt.s32.totalorder %s14, 3
      %p233 = pnand %p231, %p232
      %p234 = pneg %p233
      // Predicated region
      $region37: #{image_project_layernorm.1} parent=5 // pred_check
        _
      $region38: #{image_project_layernorm.1} parent=5 // pred_check_branch
        %236 = sbr.rel (%p233) target = $region40
      $region39: #{image_project_layernorm.1} parent=5 // pred_region
        %s237 = ssub.s32 %s14, 1
        %s238 = sand.u32 %s67, 1
        %s239 = scalar_lea.sflag [#allocation4], %s238
        %s240 = sand.u32 %s67, 1
        %s241 = smul.addr %s240, 128
        %s242 = scalar_lea.vmem [#allocation3], %s241
        // Predicated region
        $region41: #{image_project_layernorm.1} parent=39 // pred_check
          %p243 = pneg %p80
        $region42: #{image_project_layernorm.1} parent=39 // pred_check_branch
          %245 = sbr.rel (%p243) target = $region44
        $region43: #{image_project_layernorm.1} parent=39 // pred_region
          %247 = dma.done %s239, 2048
        $region44: #{image_project_layernorm.1} parent=39 // pred_fallthru
          _
        %p248 = scmp.lt.s32.totalorder %s23, 0
        %s249 = scalar_select %p248, %s23, 0
        %p250 = scmp.lt.s32.totalorder %s24, 1
        %s251 = scalar_select %p250, %s24, 1
        %s252 = smul.addr %s249, 2
        %s253 = sadd.s32 %s251, %s252
        %s254 = smul.addr %s253, 4
        %s255 = scalar_lea.vmem %s0, %s254
        %p256 = pneg %p54
        %p257 = pneg %p51
        %s258 = sand.u32 %s67, 1
        %s259 = scalar_lea.sflag [#allocation4], %s258
        %s260 = sand.u32 %s67, 1
        %s261 = smul.addr %s260, 128
        %s262 = scalar_lea.vmem [#allocation3], %s261
        %p263 = pneg %p80
        %p264 = pneg %p77
        %p265 = pneg %p101
        %p266 = pneg %p98
        %p267 = pneg %p122
        %p268 = pneg %p119
        %p269 = pneg %p143
        %p270 = pneg %p140
        %p271 = pneg %p169
        %p272 = pneg %p166
        %p273 = scmp.lt.s32.totalorder %s23, 0
        %s274 = scalar_select %p273, %s23, 0
        %s275 = smul.addr %s274, 2
        %s276 = smul.addr %s275, 4
        %s277 = scalar_lea.vmem %s5, %s276
        %p278 = scmp.lt.s32.totalorder %s23, 0
        %s279 = scalar_select %p278, %s23, 0
        %p280 = scmp.lt.s32.totalorder %s24, 1
        %s281 = scalar_select %p280, %s24, 1
        %s282 = smul.addr %s279, 2
        %s283 = sadd.s32 %s281, %s282
        %s284 = smul.addr %s283, 4
        %s285 = scalar_lea.vmem %s0, %s284
        %s286 = smul.u32 16, %s24
        %p287 = scmp.lt.s32.totalorder %s23, 0
        %s288 = scalar_select %p287, %s23, 0
        %s289 = smul.addr %s288, 2
        %s290 = smul.addr %s289, 4
        %s291 = scalar_lea.vmem %s5, %s290
        %p293 = scmp.eq.s32.totalorder %s24, 0
        // Predicated region
        $region45: #{image_project_layernorm.1} parent=39 // pred_check
          %p294 = pneg %p293
        $region46: #{image_project_layernorm.1} parent=39 // pred_check_branch
          %296 = sbr.rel (%p294) target = $region48
        $region47: #{image_project_layernorm.1} parent=39 // pred_region
          %297 = vst [vmem:[#allocation2] sm:$0xff] 0.0
          %298 = vst [vmem:[#allocation2 + $0x8] sm:$0xff] 0.0
        $region48: #{image_project_layernorm.1} parent=39 // pred_fallthru
          _
        %v299 = vld [vmem:[%s285] sm:$0xf]
        %v300 = vunpack.c.l.bf16 %v299
        %vm301 = vcmp.ne.f32.partialorder %v300, %v300
        %vm302 = vmpackc.low %vm301, %vm301
        %v303 = vsel %vm302, 0, %v299
        %v304 = vld [vmem:[#allocation2] sm:$0xff]
        %v305 = vld [vmem:[#allocation2 + $0x8] sm:$0xff]
        %v306 = vld [vmem:[%s242] sm:$0xff]
        %v307 = vld [vmem:[%s242 + $0x8] sm:$0xff]
        %v308 = vld [vmem:[%s242 + $0x10] sm:$0xff]
        %v309 = vld [vmem:[%s242 + $0x18] sm:$0xff]
        %v310 = vld [vmem:[%s242 + $0x20] sm:$0xff]
        %v311 = vld [vmem:[%s242 + $0x28] sm:$0xff]
        %v312 = vld [vmem:[%s242 + $0x30] sm:$0xff]
        %v313 = vld [vmem:[%s242 + $0x38] sm:$0xff]
        %v314 = vld [vmem:[%s242 + $0x40] sm:$0xff]
        %v315 = vld [vmem:[%s242 + $0x48] sm:$0xff]
        %v316 = vld [vmem:[%s242 + $0x50] sm:$0xff]
        %v317 = vld [vmem:[%s242 + $0x58] sm:$0xff]
        %v318 = vld [vmem:[%s242 + $0x60] sm:$0xff]
        %v319 = vld [vmem:[%s242 + $0x68] sm:$0xff]
        %v320 = vld [vmem:[%s242 + $0x70] sm:$0xff]
        %v321 = vld [vmem:[%s242 + $0x78] sm:$0xff]
        %v338 = vunpack.c.l.b16 %v306
        %v339 = vunpack.c.h.b16 %v306
        %v340 = vunpack.c.l.b16 %v307
        %v341 = vunpack.c.h.b16 %v307
        %v342 = vunpack.c.l.b16 %v308
        %v343 = vunpack.c.h.b16 %v308
        %v344 = vunpack.c.l.b16 %v309
        %v345 = vunpack.c.h.b16 %v309
        %v346 = vunpack.c.l.b16 %v310
        %v347 = vunpack.c.h.b16 %v310
        %v348 = vunpack.c.l.b16 %v311
        %v349 = vunpack.c.h.b16 %v311
        %v350 = vunpack.c.l.b16 %v312
        %v351 = vunpack.c.h.b16 %v312
        %v352 = vunpack.c.l.b16 %v313
        %v353 = vunpack.c.h.b16 %v313
        %v354 = vunpack.c.l.b16 %v314
        %v355 = vunpack.c.h.b16 %v314
        %v356 = vunpack.c.l.b16 %v315
        %v357 = vunpack.c.h.b16 %v315
        %v358 = vunpack.c.l.b16 %v316
        %v359 = vunpack.c.h.b16 %v316
        %v360 = vunpack.c.l.b16 %v317
        %v361 = vunpack.c.h.b16 %v317
        %v362 = vunpack.c.l.b16 %v318
        %v363 = vunpack.c.h.b16 %v318
        %v364 = vunpack.c.l.b16 %v319
        %v365 = vunpack.c.h.b16 %v319
        %v366 = vunpack.c.l.b16 %v320
        %v367 = vunpack.c.h.b16 %v320
        %v368 = vunpack.c.l.b16 %v321
        %v369 = vunpack.c.h.b16 %v321
        %v370 = vpack.c.b16 %v340, %v338
        %v371 = vpack.c.b16 %v341, %v339
        %v372 = vpack.c.b16 %v344, %v342
        %v373 = vpack.c.b16 %v345, %v343
        %v374 = vpack.c.b16 %v348, %v346
        %v375 = vpack.c.b16 %v349, %v347
        %v376 = vpack.c.b16 %v352, %v350
        %v377 = vpack.c.b16 %v353, %v351
        %v378 = vpack.c.b16 %v356, %v354
        %v379 = vpack.c.b16 %v357, %v355
        %v380 = vpack.c.b16 %v360, %v358
        %v381 = vpack.c.b16 %v361, %v359
        %v382 = vpack.c.b16 %v364, %v362
        %v383 = vpack.c.b16 %v365, %v363
        %v384 = vpack.c.b16 %v368, %v366
        %v385 = vpack.c.b16 %v369, %v367
        %402 = vmatpush.bf16.msra.mxu0 %v384
        %403 = vmatpush.bf16.msra.mxu0 %v382
        %404 = vmatpush.bf16.msra.mxu0 %v380
        %405 = vmatpush.bf16.msra.mxu0 %v378
        %406 = vmatpush.bf16.msra.mxu0 %v376
        %407 = vmatpush.bf16.msra.mxu0 %v374
        %408 = vmatpush.bf16.msra.mxu0 %v372
        %409 = vmatpush.bf16.msra.mxu0 %v370
        %410 = vmatmul.bf16.gmra.mxu0 %v303
        %v411 = vpop.f32.mrf.mxu0
        %v412 = vadd.f32 0.0, %v411
        %v413 = vpop.f32.mrf.mxu0
        %414 = vdwg.mxu0
        %415 = vmatpush.bf16.msra.mxu0 %v385
        %416 = vmatpush.bf16.msra.mxu0 %v383
        %417 = vmatpush.bf16.msra.mxu0 %v381
        %418 = vmatpush.bf16.msra.mxu0 %v379
        %419 = vmatpush.bf16.msra.mxu0 %v377
        %420 = vmatpush.bf16.msra.mxu0 %v375
        %421 = vmatpush.bf16.msra.mxu0 %v373
        %422 = vmatpush.bf16.msra.mxu0 %v371
        %423 = vmatmul.bf16.gmra.mxu0 %v303
        %v424 = vpop.f32.mrf.mxu0
        %v425 = vadd.f32 0.0, %v424
        %v426 = vpop.f32.mrf.mxu0
        %427 = vdwg.mxu0
        %v428 = vadd.f32 %v304, %v412
        %v429 = vadd.f32 %v305, %v425
        %430 = vst [vmem:[#allocation2] sm:$0xff] %v428
        %431 = vst [vmem:[#allocation2 + $0x8] sm:$0xff] %v429
        %p432 = scmp.eq.s32.totalorder %s24, 1
        // Predicated region
        $region49: #{image_project_layernorm.1} parent=39 // pred_check
          %p433 = pneg %p432
        $region50: #{image_project_layernorm.1} parent=39 // pred_check_branch
          %435 = sbr.rel (%p433) target = $region52
        $region51: #{image_project_layernorm.1} parent=39 // pred_region
          %v436 = vld [vmem:[#allocation2] sm:$0xff]
          %v437 = vld [vmem:[#allocation2 + $0x8] sm:$0xff]
          %v438 = vld [vmem:[%s2] sm:$0x3]
          %v440 = vperm.slane %v438, 0
          %v441 = vperm.slane %v438, 1
          %v444 = vadd.f32 %v436, %v440
          %v445 = vadd.f32 %v437, %v441
          %v446 = vadd.f32 %v444, %v445
          %447 = vadd.xlane.f32.xlu0 %v446
          %v448 = vpop.xlane.xlu0 %447
          %v449 = vrcp.pop 256.0
          %v450 = vmul.f32 256.0, %v449
          %v451 = vsub.f32 1.0, %v450
          %v452 = vmul.f32 %v449, %v451
          %v453 = vadd.f32 %v449, %v452
          %vm454 = vweird.f32 %v449
          %v455 = vsel %vm454, %v449, %v453
          %v456 = vmul.f32 %v448, %v455
          %v457 = vmul.f32 %v444, %v444
          %v458 = vmul.f32 %v445, %v445
          %v459 = vadd.f32 %v457, %v458
          %460 = vadd.xlane.f32.xlu0 %v459
          %v461 = vpop.xlane.xlu0 %460
          %v462 = vmul.f32 %v461, %v455
          %v463 = vmul.f32 %v456, %v456
          %v464 = vsub.f32 %v462, %v463
          %v465 = vmax.f32 %v464, 0.0
          %v466 = vsub.f32 %v444, %v456
          %v467 = vsub.f32 %v445, %v456
          %v468 = vadd.f32 %v465, 1e-06
          %v469 = vrsqrt.pop %v468
          %v470 = vmul.f32 %v469, %v468
          %v471 = vmul.f32 %v470, %v469
          %v472 = vmul.f32 0.5, %v471
          %v473 = vsub.f32 1.5, %v472
          %v474 = vmul.f32 %v469, %v473
          %vm475 = vweird.f32 %v468
          %vm476 = vweird.f32 %v469
          %vm477 = vmor %vm475, %vm476
          %v478 = vsel %vm477, %v469, %v474
          %v479 = vmul.f32 %v466, %v478
          %v480 = vmul.f32 %v467, %v478
          %v481 = vld [vmem:[%s3] sm:$0x3]
          %v483 = vperm.slane %v481, 0
          %v484 = vperm.slane %v481, 1
          %v487 = vmul.f32 %v479, %v483
          %v488 = vmul.f32 %v480, %v484
          %v489 = vld [vmem:[%s4] sm:$0x3]
          %v491 = vperm.slane %v489, 0
          %v492 = vperm.slane %v489, 1
          %v495 = vadd.f32 %v487, %v491
          %v496 = vadd.f32 %v488, %v492
          %v497 = vpack.c.bf16 %v496, %v495
          %498 = vst [vmem:[%s291] sm:$0xff] %v497
        $region52: #{image_project_layernorm.1} parent=39 // pred_fallthru
          _
        %p499 = scmp.lt.s32.totalorder %s23, 0
        %s500 = scalar_select %p499, %s23, 0
        %s501 = smul.addr %s500, 2
        %s502 = smul.addr %s501, 4
        %s503 = scalar_lea.vmem %s5, %s502
        // Predicated region
        $region53: #{image_project_layernorm.1} parent=39 // pred_check
          %p504 = pneg %p166
        $region54: #{image_project_layernorm.1} parent=39 // pred_check_branch
          %506 = sbr.rel (%p504) target = $region56
        $region55: #{image_project_layernorm.1} parent=39 // pred_region
          _
        $region56: #{image_project_layernorm.1} parent=39 // pred_fallthru
          _
        // Predicated region
        $region57: #{image_project_layernorm.1} parent=39 // pred_check
          %p507 = pneg %p166
        $region58: #{image_project_layernorm.1} parent=39 // pred_check_branch
          %509 = sbr.rel (%p507) target = $region60
        $region59: #{image_project_layernorm.1} parent=39 // pred_region
          %p510 = scmp.lt.s32.totalorder %s23, 0
          %s511 = scalar_select %p510, %s23, 0
          %s512 = smul.addr %s511, 2
          %s513 = smul.addr %s512, 4
          %s514 = scalar_lea.vmem %s5, %s513
        $region60: #{image_project_layernorm.1} parent=39 // pred_fallthru
          _
      $region40: #{image_project_layernorm.1} parent=5 // pred_fallthru
        _
      %p515 = scmp.le.s32.totalorder 2, %s14
      // Predicated region
      $region61: #{image_project_layernorm.1} parent=5 // pred_check
        %p516 = pneg %p515
      $region62: #{image_project_layernorm.1} parent=5 // pred_check_branch
        %518 = sbr.rel (%p516) target = $region64
      $region63: #{image_project_layernorm.1} parent=5 // pred_region
        %s519 = ssub.s32 %s14, 2
      $region64: #{image_project_layernorm.1} parent=5 // pred_fallthru
        _
    $region6: #{image_project_layernorm.1} parent=1 // loop_footer
      %s18 = sadd.s32 1, %s14
    $region7: #{image_project_layernorm.1} parent=1 // loop_footer_branch
      %13 = sbr.rel target = $region3
    $region8: #{image_project_layernorm.1} parent=1 // loop_exit
      _
    %520 = vsyncpa [#allocation4], 1
    %s521 = scalar_lea.sflag [#allocation4], 1
    %522 = vsyncpa %s521, 1

</llo_original>
